<compile_context>
chip_gen: v7x
topology: tpu7x:2x2x1
jax: 0.10.0
libtpu: 0.0.40
codegen_flags: <defaults>
</compile_context>

<pallas_src>
import functools

import jax
import jax.numpy as jnp
from jax.experimental import pallas as pl
from jax.experimental.pallas import tpu as pltpu


def _tv_partials_kernel(mh_ref, mw_ref, x_ref, out_ref, *, w, nc, tc, ragged):
    # mh_ref, mw_ref : (1, L) f32 0/1 seam masks (grid-invariant, DMA'd once)
    # x_ref          : (tc, L) tile, one flattened HxW image per row
    # out_ref        : (1, 2) f32 in SMEM -> [h_tv_partial, w_tv_partial]
    x = x_ref[...].astype(jnp.float32)          # upcast per-tile (bf16 inputs)
    L = x.shape[1]

    if ragged:
        # Last tile overhangs N*C: zero invalid rows.  Use a select (not a
        # multiply) so any undefined out-of-bounds data -- including NaN --
        # is eliminated.  Diffs are per-row, so zero rows contribute exactly 0.
        row = (jax.lax.broadcasted_iota(jnp.int32, (tc, 1), 0)
               + pl.program_id(0) * tc)
        x = jnp.where(row < nc, x, 0.0)

    # Vertical diffs: x[h+1,c]-x[h,c] == flat[j+W]-flat[j];
    # roll by (L-W) gives result[j] = flat[(j+W) mod L]; wrapped tail masked.
    dh = pltpu.roll(x, L - w, axis=1) - x
    # Horizontal diffs: x[h,c+1]-x[h,c] == flat[j+1]-flat[j]; row seams masked.
    dw = pltpu.roll(x, L - 1, axis=1) - x

    out_ref[0, 0] = jnp.sum(dh * dh * mh_ref[...])
    out_ref[0, 1] = jnp.sum(dw * dw * mw_ref[...])


def _vmem_limit_bytes():
    """Scoped-VMEM limit: ~3/4 of physical, capped at 96 MiB (v7x-safe)."""
    try:
        cap = int(pltpu.get_tpu_info().vmem_capacity_bytes)
    except Exception:
        cap = 64 * 1024 * 1024          # conservative (v7x-sized) fallback
    return min(96 * 1024 * 1024, (3 * cap) // 4)


def _pick_tile_rows(nc, target_rows, pack):
    """Rows per tile: sublane-pack aligned, preferring a divisor of nc."""
    if target_rows >= nc or nc <= pack:
        return nc                       # single tile / full leading dim
    tc = max(pack, (min(target_rows, nc) // pack) * pack)
    # Prefer a divisor of nc (avoids the ragged tail + in-kernel row mask).
    for cand in range(tc, max(pack, tc // 2) - 1, -pack):
        if nc % cand == 0:
            return cand
    return tc


def tv_loss(x, weight=1.0, max_tile_rows=None):
    """x: (N, C, H, W) float array. Returns scalar TV loss (matches TVLoss)."""
    B, C, H, W = x.shape
    NC, L = B * C, H * W
    # NOTE: H==1 or W==1 divides by zero, exactly like the PyTorch original.
    count_h = C * (H - 1) * W
    count_w = C * H * (W - 1)

    x2 = x.reshape(NC, L)               # lane-dense view, no HBM copy

    # ---- dtype-aware tile selection along N*C ----
    itemsize = jnp.dtype(x.dtype).itemsize
    pack = max(8, 32 // itemsize)       # sublane packing: 8 f32, 16 bf16, 32 i8
    vmem_limit = _vmem_limit_bytes()
    # Per-row VMEM estimate: double-buffered input + ~4 f32 tile temporaries.
    row_bytes = L * (2 * itemsize + 16)
    target_rows = max(1, ((3 * vmem_limit) // 4) // row_bytes)
    if max_tile_rows is not None:
        target_rows = min(target_rows, max_tile_rows)
    # TODO(synk): few-but-huge images (one flattened row exceeds the budget)
    # should tile along H with a 1-row halo instead of whole-image rows.
    tc = _pick_tile_rows(NC, target_rows, pack)
    num_tiles = (NC + tc - 1) // tc
    ragged = (num_tiles * tc != NC)

    # ---- grid-invariant seam masks, computed once outside the kernel ----
    lane = jnp.arange(L, dtype=jnp.int32)
    mask_h = (lane < (L - W)).astype(jnp.float32).reshape(1, L)
    mask_w = ((lane % W) != (W - 1)).astype(jnp.float32).reshape(1, L)

    kernel = functools.partial(
        _tv_partials_kernel, w=W, nc=NC, tc=tc, ragged=ragged)

    partials = pl.pallas_call(
        kernel,
        out_shape=jax.ShapeDtypeStruct((num_tiles, 2), jnp.float32),
        grid_spec=pltpu.PrefetchScalarGridSpec(
            num_scalar_prefetch=0,
            grid=(num_tiles,),
            in_specs=[
                pl.BlockSpec((1, L), lambda i: (0, 0)),    # mask_h (resident)
                pl.BlockSpec((1, L), lambda i: (0, 0)),    # mask_w (resident)
                pl.BlockSpec((tc, L), lambda i: (i, 0)),   # image rows
            ],
            out_specs=pl.BlockSpec((1, 2), lambda i: (i, 0),
                                   memory_space=pltpu.SMEM),
        ),
        compiler_params=pltpu.CompilerParams(
            dimension_semantics=("parallel",),   # independent tiles (megacore OK)
            vmem_limit_bytes=vmem_limit,
        ),
    )(mask_h, mask_w, x2)

    h_tv = jnp.sum(partials[:, 0])
    w_tv = jnp.sum(partials[:, 1])
    return weight * 2.0 * (h_tv / count_h + w_tv / count_w) / B


def _tv_loss_ref(x, weight=1.0):
    """Pure-JAX reference mirroring the PyTorch TVLoss module exactly."""
    B, C, H, W = x.shape
    count_h = C * (H - 1) * W
    count_w = C * H * (W - 1)
    h_tv = jnp.sum((x[:, :, 1:, :] - x[:, :, : H - 1, :]) ** 2)
    w_tv = jnp.sum((x[:, :, :, 1:] - x[:, :, :, : W - 1]) ** 2)
    return weight * 2.0 * (h_tv / count_h + w_tv / count_w) / B


if __name__ == "__main__":
    k0, k1, k2 = jax.random.split(jax.random.PRNGKey(0), 3)

    # 1) Small NCHW shape consistent with the module's forward (single tile).
    x1 = jax.random.normal(k0, (2, 4, 16, 16), dtype=jnp.float32)
    out1 = jax.block_until_ready(tv_loss(x1, weight=1.0))
    ref1 = _tv_loss_ref(x1, weight=1.0)
    assert jnp.allclose(out1, ref1, rtol=1e-4, atol=1e-5), (out1, ref1)

    # 2) Multi-tile path: NC=16 forced into two 8-row tiles (exact split).
    x2 = jax.random.normal(k1, (2, 8, 16, 16), dtype=jnp.float32)
    out2 = jax.block_until_ready(tv_loss(x2, weight=0.5, max_tile_rows=8))
    ref2 = _tv_loss_ref(x2, weight=0.5)
    assert jnp.allclose(out2, ref2, rtol=1e-4, atol=1e-5), (out2, ref2)

    # 3) Ragged last tile: NC=10 with 8-row tiles -> in-kernel row mask.
    x3 = jax.random.normal(k2, (2, 5, 16, 16), dtype=jnp.float32)
    out3 = jax.block_until_ready(tv_loss(x3, weight=1.0, max_tile_rows=8))
    ref3 = _tv_loss_ref(x3, weight=1.0)
    assert jnp.allclose(out3, ref3, rtol=1e-4, atol=1e-5), (out3, ref3)

    print("KERNEL_OK")
</pallas_src>

<mosaic_0001>
module attributes {stable_mosaic.version = 11 : i64} {
  func.func @_tv_partials_kernel(%arg0: i32, %arg1: memref<1x256xf32, #tpu.memory_space<vmem>>, %arg2: memref<1x256xf32, #tpu.memory_space<vmem>>, %arg3: memref<8x256xf32, #tpu.memory_space<vmem>>, %arg4: memref<1x2xf32, #tpu.memory_space<smem>>) attributes {dimension_semantics = [#tpu.dimension_semantics<parallel>], iteration_bounds = array<i64: 1>, scalar_prefetch = 0 : i64, scratch_operands = 0 : i64, tpu.core_type = #tpu.core_type<tc>, window_params = [{pipeline_mode = #tpu.pipeline_mode<synchronous>, transform_indices = @transform_0, window_bounds = array<i64: 1, 256>}, {pipeline_mode = #tpu.pipeline_mode<synchronous>, transform_indices = @transform_1, window_bounds = array<i64: 1, 256>}, {transform_indices = @transform_2, window_bounds = array<i64: 8, 256>}, {transform_indices = @transform_3, window_bounds = array<i64: 1, 2>}]} {
    %c0 = arith.constant 0 : index
    %c0_0 = arith.constant 0 : index
    %0 = vector.load %arg3[%c0, %c0_0] : memref<8x256xf32, #tpu.memory_space<vmem>>, vector<8x256xf32>
    %c240_i32 = arith.constant 240 : i32
    %1 = tpu.dynamic_rotate %0 by %c240_i32 dim 1 : vector<8x256xf32>, i32 -> vector<8x256xf32>
    %2 = arith.subf %1, %0 : vector<8x256xf32>
    %c255_i32 = arith.constant 255 : i32
    %3 = tpu.dynamic_rotate %0 by %c255_i32 dim 1 : vector<8x256xf32>, i32 -> vector<8x256xf32>
    %4 = arith.subf %3, %0 : vector<8x256xf32>
    %5 = arith.mulf %2, %2 : vector<8x256xf32>
    %c0_1 = arith.constant 0 : index
    %c0_2 = arith.constant 0 : index
    %6 = vector.load %arg1[%c0_1, %c0_2] : memref<1x256xf32, #tpu.memory_space<vmem>>, vector<1x256xf32>
    %7 = vector.broadcast %6 : vector<1x256xf32> to vector<8x256xf32>
    %8 = arith.mulf %5, %7 : vector<8x256xf32>
    %9 = vector.shape_cast %8 : vector<8x256xf32> to vector<1x8x256xf32>
    %cst = arith.constant dense<0.000000e+00> : vector<1xf32>
    %10 = vector.multi_reduction <add>, %9, %cst [1, 2] : vector<1x8x256xf32> to vector<1xf32>
    %11 = vector.shape_cast %10 : vector<1xf32> to vector<1x1x1xf32>
    %12 = vector.extract %11[0, 0, 0] : f32 from vector<1x1x1xf32>
    %c0_3 = arith.constant 0 : index
    %c0_4 = arith.constant 0 : index
    %13 = memref.load %arg4[%c0_3, %c0_4] : memref<1x2xf32, #tpu.memory_space<smem>>
    memref.store %12, %arg4[%c0_3, %c0_4] : memref<1x2xf32, #tpu.memory_space<smem>>
    %14 = arith.mulf %4, %4 : vector<8x256xf32>
    %c0_5 = arith.constant 0 : index
    %c0_6 = arith.constant 0 : index
    %15 = vector.load %arg2[%c0_5, %c0_6] : memref<1x256xf32, #tpu.memory_space<vmem>>, vector<1x256xf32>
    %16 = vector.broadcast %15 : vector<1x256xf32> to vector<8x256xf32>
    %17 = arith.mulf %14, %16 : vector<8x256xf32>
    %18 = vector.shape_cast %17 : vector<8x256xf32> to vector<1x8x256xf32>
    %cst_7 = arith.constant dense<0.000000e+00> : vector<1xf32>
    %19 = vector.multi_reduction <add>, %18, %cst_7 [1, 2] : vector<1x8x256xf32> to vector<1xf32>
    %20 = vector.shape_cast %19 : vector<1xf32> to vector<1x1x1xf32>
    %21 = vector.extract %20[0, 0, 0] : f32 from vector<1x1x1xf32>
    %c0_8 = arith.constant 0 : index
    %c1 = arith.constant 1 : index
    %22 = memref.load %arg4[%c0_8, %c1] : memref<1x2xf32, #tpu.memory_space<smem>>
    memref.store %21, %arg4[%c0_8, %c1] : memref<1x2xf32, #tpu.memory_space<smem>>
    return
  }
  func.func @transform_0(%arg0: i32) -> (i32, i32) {
    %c0_i32 = arith.constant 0 : i32
    %c0_i32_0 = arith.constant 0 : i32
    %c0_i32_1 = arith.constant 0 : i32
    return %c0_i32, %c0_i32_0 : i32, i32
  }
  func.func @transform_1(%arg0: i32) -> (i32, i32) {
    %c0_i32 = arith.constant 0 : i32
    %c0_i32_0 = arith.constant 0 : i32
    %c0_i32_1 = arith.constant 0 : i32
    return %c0_i32, %c0_i32_0 : i32, i32
  }
  func.func @transform_2(%arg0: i32) -> (i32, i32) {
    %c0_i32 = arith.constant 0 : i32
    %c0_i32_0 = arith.constant 0 : i32
    return %arg0, %c0_i32 : i32, i32
  }
  func.func @transform_3(%arg0: i32) -> (i32, i32) {
    %c0_i32 = arith.constant 0 : i32
    %c0_i32_0 = arith.constant 0 : i32
    return %arg0, %c0_i32 : i32, i32
  }
}

</mosaic_0001>

<llo_original>
// kernel: tpu_custom_call.1
$region0: #{tpu_custom_call.1}
  #allocation0 [shape = 'u32[]', space=smem, size = 0x4, offset = 0x4, fixed_abs, tag = 'smem constant byte address 0x4 - core index']
  #allocation1 [shape = 'u32[144,128]{1,0:T(1,128)}', space=vmem, size = 0x12000, scoped, tag = 'internal scratch']
  %s0 = inlined_call_operand.hbm [shape: f32[1,256], index: 0, kind: input, shape index: {}]
  %s1 = inlined_call_operand.vmem [shape: f32[1,256], index: 1, kind: input, shape index: {}]
  %s2 = inlined_call_operand.hbm [shape: f32[8,256], index: 2, kind: input, shape index: {}]
  %s3 = inlined_call_operand.hbm [shape: f32[1,2], index: 3, kind: output, shape index: {}]
  %s4 = sld [smem:[#allocation0]]
  $region30: #{tpu_custom_call.1} parent=0
    _
  %s6 = ssub.s32 1, %s4
  %s7 = scalar_select 0, %s6, %s4
  $region1: #{tpu_custom_call.1} parent=0
    #allocation2 [shape = 'u8[1024]{0}', space=vmem, size = 0x400, scoped, tag = 'input window, operand 0, single buffered']
    #allocation3 [shape = 's32[1]{0}', space=sflag, size = 0x4, scoped, tag = 'scoped memory for tpu_custom_call.1']
    #allocation4 [shape = 's32[1]{0}', space=sflag, size = 0x4, scoped, tag = 'scoped memory for tpu_custom_call.1']
    #allocation5 [shape = 'u8[8192]{0}', space=vmem, size = 0x2000, scoped, tag = 'input window, operand 2, single buffered']
    #allocation6 [shape = 's32[1]{0}', space=sflag, size = 0x4, scoped, tag = 'scoped memory for tpu_custom_call.1']
    #allocation7 [shape = 'u8[512]{0}', space=smem, size = 0x200, scoped, tag = 'output window, operand 0, single buffered']
    %8 = vsyncpa [#allocation3], 0
    %9 = vsyncpa [#allocation6], 0
    %10 = vsyncpa [#allocation4], 0
    // Predicated region
    $region2: #{tpu_custom_call.1} parent=1 // pred_check
      _
    $region3: #{tpu_custom_call.1} parent=1 // pred_check_branch
      %12 = sbr.rel (0) target = $region5
    $region4: #{tpu_custom_call.1} parent=1 // pred_region
      %s14 = ssub.s32 32, 32
      %15 = vsyncadd [#allocation3], %s14
      %s17 = sshll.u32 [#allocation2], 4
      %s18 = int_to_ptr.vmem [resolvable:$true] %s17
      %20 = dma.hbm_to_vmem [thread:$0]  %s0, 32, %s18, [#allocation3]
    $region5: #{tpu_custom_call.1} parent=1 // pred_fallthru
      _
    // Predicated region
    $region6: #{tpu_custom_call.1} parent=1 // pred_check
      _
    $region7: #{tpu_custom_call.1} parent=1 // pred_check_branch
      %22 = sbr.rel (0) target = $region9
    $region8: #{tpu_custom_call.1} parent=1 // pred_region
      _
    $region9: #{tpu_custom_call.1} parent=1 // pred_fallthru
      _
    // Predicated region
    $region10: #{tpu_custom_call.1} parent=1 // pred_check
      _
    $region11: #{tpu_custom_call.1} parent=1 // pred_check_branch
      %24 = sbr.rel (0) target = $region13
    $region12: #{tpu_custom_call.1} parent=1 // pred_region
      %s26 = ssub.s32 256, 256
      %27 = vsyncadd [#allocation6], %s26
      %s29 = sshll.u32 [#allocation5], 4
      %s30 = int_to_ptr.vmem [resolvable:$true] %s29
      %32 = dma.hbm_to_vmem [thread:$0]  %s2, 256, %s30, [#allocation6]
    $region13: #{tpu_custom_call.1} parent=1 // pred_fallthru
      _
    // Predicated region
    $region14: #{tpu_custom_call.1} parent=1 // pred_check
      _
    $region15: #{tpu_custom_call.1} parent=1 // pred_check_branch
      %34 = sbr.rel (0) target = $region17
    $region16: #{tpu_custom_call.1} parent=1 // pred_region
      %35 = dma.done [#allocation3], 32
    $region17: #{tpu_custom_call.1} parent=1 // pred_fallthru
      _
    // Predicated region
    $region18: #{tpu_custom_call.1} parent=1 // pred_check
      _
    $region19: #{tpu_custom_call.1} parent=1 // pred_check_branch
      %37 = sbr.rel (0) target = $region21
    $region20: #{tpu_custom_call.1} parent=1 // pred_region
      %38 = dma.done [#allocation6], 256
    $region21: #{tpu_custom_call.1} parent=1 // pred_fallthru
      _
    %v39 = vld [vmem:[#allocation5] sm:$0xff]
    %v40 = vld [vmem:[#allocation5 + $0x8] sm:$0xff]
    %41 = vrot.lane.b32.xlu0 %v39, 112
    %v42 = vpop.permute.xlu0 %41
    %43 = vrot.lane.b32.xlu0 %v40, 112
    %v44 = vpop.permute.xlu0 %43
    %v45 = vlaneseq
    %v46 = vand.u32 %v45, 127
    %vm47 = vcmp.lt.s32.totalorder %v46, 112
    %v48 = vsel %vm47, %v42, %v44
    %v49 = vsel %vm47, %v44, %v42
    %v50 = vsub.f32 %v48, %v39
    %v51 = vsub.f32 %v49, %v40
    %52 = vrot.lane.b32.xlu0 %v39, 127
    %v53 = vpop.permute.xlu0 %52
    %54 = vrot.lane.b32.xlu0 %v40, 127
    %v55 = vpop.permute.xlu0 %54
    %vm56 = vcmp.lt.s32.totalorder %v46, 127
    %v57 = vsel %vm56, %v53, %v55
    %v58 = vsel %vm56, %v55, %v53
    %v59 = vsub.f32 %v57, %v39
    %v60 = vsub.f32 %v58, %v40
    %v61 = vmul.f32 %v50, %v50
    %v62 = vmul.f32 %v51, %v51
    %v63 = vld [vmem:[#allocation2] sm:$0x3]
    %v65 = vlaneseq
    %v66 = vshrl.u32 %v65, 7
    %v67 = vsub.s32 0, %v66
    %v68 = vrot.slane %v63, %v67
    %v69 = vlaneseq
    %v70 = vshrl.u32 %v69, 7
    %v71 = vsub.s32 1, %v70
    %v72 = vrot.slane %v63, %v71
    %v75 = vmul.f32 %v61, %v68
    %v76 = vmul.f32 %v62, %v72
    %v77 = vadd.f32 %v75, %v76
    %78 = vadd.xlane.f32.xlu0 %v77
    %v79 = vpop.xlane.xlu0 %78
    %v80 = vrot.slane %v79, 4
    %v81 = vadd.f32 %v79, %v80
    %v82 = vrot.slane %v81, 2
    %v83 = vadd.f32 %v81, %v82
    %v84 = vrot.slane %v83, 1
    %v85 = vadd.f32 %v83, %v84
    %s86 = vtos %v85
    %s87 = scalar_lea.smem [#allocation7], 0
    %88 = sst [smem:[%s87]] %s86
    %v89 = vmul.f32 %v59, %v59
    %v90 = vmul.f32 %v60, %v60
    %v91 = vld [vmem:[%s1] sm:$0x3]
    %v93 = vlaneseq
    %v94 = vshrl.u32 %v93, 7
    %v95 = vsub.s32 0, %v94
    %v96 = vrot.slane %v91, %v95
    %v97 = vlaneseq
    %v98 = vshrl.u32 %v97, 7
    %v99 = vsub.s32 1, %v98
    %v100 = vrot.slane %v91, %v99
    %v103 = vmul.f32 %v89, %v96
    %v104 = vmul.f32 %v90, %v100
    %v105 = vadd.f32 %v103, %v104
    %106 = vadd.xlane.f32.xlu0 %v105
    %v107 = vpop.xlane.xlu0 %106
    %v108 = vrot.slane %v107, 4
    %v109 = vadd.f32 %v107, %v108
    %v110 = vrot.slane %v109, 2
    %v111 = vadd.f32 %v109, %v110
    %v112 = vrot.slane %v111, 1
    %v113 = vadd.f32 %v111, %v112
    %s114 = vtos %v113
    %s115 = scalar_lea.smem [#allocation7], 1
    %116 = sst [smem:[%s115]] %s114
    // Predicated region
    $region22: #{tpu_custom_call.1} parent=1 // pred_check
      _
    $region23: #{tpu_custom_call.1} parent=1 // pred_check_branch
      %118 = sbr.rel (0) target = $region25
    $region24: #{tpu_custom_call.1} parent=1 // pred_region
      %s120 = ssub.s32 16, 16
      %121 = vsyncadd [#allocation4], %s120
      %124 = dma.smem_to_hbm [#allocation7], 16, %s3, [#allocation4]
    $region25: #{tpu_custom_call.1} parent=1 // pred_fallthru
      _
    // Predicated region
    $region26: #{tpu_custom_call.1} parent=1 // pred_check
      _
    $region27: #{tpu_custom_call.1} parent=1 // pred_check_branch
      %126 = sbr.rel (0) target = $region29
    $region28: #{tpu_custom_call.1} parent=1 // pred_region
      %127 = dma.done [#allocation4], 16
    $region29: #{tpu_custom_call.1} parent=1 // pred_fallthru
      _
    %128 = sfence
    %129 = vsyncpa [#allocation3], 1
    %130 = vsyncpa [#allocation6], 1
    %131 = vsyncpa [#allocation4], 1

</llo_original>
